<compile_context>
chip_gen: v5e
topology: v5e:2x2
jax: 0.10.0
libtpu: 0.0.40
codegen_flags: <defaults>
</compile_context>

<pallas_src>
import functools

import jax
import jax.numpy as jnp
from jax.experimental import pallas as pl
from jax.experimental.pallas import tpu as pltpu

INPUT_DIM = 447
OUTPUT_RANGE = 12.0


def don_kernel(x_ref, w_ref, b_ref, o_ref):
    # x_ref: (tb, D) VMEM (streamed)   w_ref: (D, 1) VMEM (resident)
    # b_ref: (1, 1) SMEM scalar        o_ref: (tb, 1) VMEM
    z = jnp.dot(x_ref[...], w_ref[...], preferred_element_type=jnp.float32)
    z = z + b_ref[0, 0]  # scalar bias from SMEM
    o_ref[...] = (jax.nn.sigmoid(z) * OUTPUT_RANGE).astype(o_ref.dtype)


def _round_up(n, m):
    return ((n + m - 1) // m) * m


def _default_block_rows():
    """Per-generation batch-tile default (mem-bound kernel: bigger tile = less step overhead)."""
    try:
        kind = jax.devices()[0].device_kind.lower()
    except Exception:  # pragma: no cover - e.g. no devices yet
        return 2048
    if "v5 lite" in kind or "v5e" in kind or "v5lite" in kind:
        return 2048          # 16 MiB scoped-VMEM default on v5e
    if "v6" in kind:
        return 4096          # fits the 32 MiB scoped default with headroom
    if "v7" in kind or "7x" in kind:
        return 8192          # 64 MiB physical / TC; vmem_limit_bytes raised below
    return 2048              # conservative for unknown chips


@functools.partial(jax.jit, static_argnames=("block_rows",))
def _direct_nonlinear_nn_impl(x, w, b, *, block_rows):
    B, D = x.shape
    itemsize = jnp.dtype(x.dtype).itemsize

    # Batch tile: multiple of 8 sublanes, capped so (a) the target tile size is
    # respected, (b) there are >= 2 grid steps whenever possible (v7x megacore),
    # (c) the double-buffered x tile stays well under physical VMEM.
    tb = min(_round_up(block_rows, 8), _round_up(pl.cdiv(B, 2), 8))
    tb_cap = max(8, ((24 << 20) // (D * itemsize)) // 8 * 8)  # <=24 MiB per x buffer
    tb = max(8, min(tb, tb_cap))
    grid = pl.cdiv(B, tb)

    w_p = jnp.asarray(w, jnp.float32).reshape(D, 1)
    b_p = jnp.asarray(b, jnp.float32).reshape(1, 1)

    # Scoped-VMEM budget from the actual footprint (double-buffered x + out, resident w).
    vmem_limit = int(min(2 * (tb * D * itemsize + tb * 4) + 2 * D * 4 + (8 << 20),
                         60 << 20))

    out = pl.pallas_call(
        don_kernel,
        out_shape=jax.ShapeDtypeStruct((B, 1), jnp.float32),
        grid=(grid,),
        in_specs=[
            pl.BlockSpec((tb, D), lambda i: (i, 0)),             # streamed batch tiles
            pl.BlockSpec((D, 1), lambda i: (0, 0)),              # VMEM-resident weight
            pl.BlockSpec(memory_space=pltpu.MemorySpace.SMEM),   # scalar bias
        ],
        out_specs=pl.BlockSpec((tb, 1), lambda i: (i, 0)),
        compiler_params=pltpu.CompilerParams(
            dimension_semantics=("parallel",),                   # v7x: shard across both TCs
            vmem_limit_bytes=vmem_limit,
        ),
    )(x, w_p, b_p)
    return out


def direct_nonlinear_nn(x, w, b, *, block_rows=None):
    """x: (B, D) f32/bf16, w: (D, 1), b: (1, 1) -> (B, 1) f32."""
    if block_rows is None:
        block_rows = _default_block_rows()
    return _direct_nonlinear_nn_impl(x, w, b, block_rows=int(block_rows))


def init_params(key, input_dim=INPUT_DIM):
    """Deterministic init mimicking torch.nn.Linear default (U(-1/sqrt(D), 1/sqrt(D)))."""
    kw, kb = jax.random.split(key)
    bound = 1.0 / jnp.sqrt(jnp.float32(input_dim))
    w = jax.random.uniform(kw, (input_dim, 1), jnp.float32, -bound, bound)
    b = jax.random.uniform(kb, (1, 1), jnp.float32, -bound, bound)
    return w, b


if __name__ == "__main__":
    key = jax.random.PRNGKey(0)
    kx, kx2, kp = jax.random.split(key, 3)
    w, b = init_params(kp)

    # Small shape consistent with the module: a batch of 447-dim feature vectors.
    B = 8
    x = jax.random.normal(kx, (B, INPUT_DIM), jnp.float32)
    out = jax.block_until_ready(direct_nonlinear_nn(x, w, b))
    ref = jax.nn.sigmoid(x @ w + b) * OUTPUT_RANGE
    assert out.shape == (B, 1)
    assert jnp.allclose(out, ref, atol=1e-5, rtol=1e-5)

    # Exercise the multi-step cdiv grid + ragged last block (B not a tile multiple).
    B2 = 300
    x2 = jax.random.normal(kx2, (B2, INPUT_DIM), jnp.float32)
    out2 = jax.block_until_ready(direct_nonlinear_nn(x2, w, b, block_rows=128))
    ref2 = jax.nn.sigmoid(x2 @ w + b) * OUTPUT_RANGE
    assert out2.shape == (B2, 1)
    assert jnp.allclose(out2, ref2, atol=1e-5, rtol=1e-5)

    print("KERNEL_OK")
</pallas_src>

<mosaic_0001>
module attributes {stable_mosaic.version = 11 : i64} {
  func.func @don_kernel(%arg0: i32, %arg1: memref<8x447xf32, #tpu.memory_space<vmem>>, %arg2: memref<447x1xf32, #tpu.memory_space<vmem>>, %arg3: memref<1x1xf32, #tpu.memory_space<smem>>, %arg4: memref<8x1xf32, #tpu.memory_space<vmem>>) attributes {dimension_semantics = [#tpu.dimension_semantics<parallel>], iteration_bounds = array<i64: 1>, scalar_prefetch = 0 : i64, scratch_operands = 0 : i64, tpu.core_type = #tpu.core_type<tc>, window_params = [{transform_indices = @transform_0, window_bounds = array<i64: 8, 447>}, {pipeline_mode = #tpu.pipeline_mode<synchronous>, transform_indices = @transform_1, window_bounds = array<i64: 447, 1>}, {transform_indices = @transform_2, window_bounds = array<i64: 1, 1>}, {transform_indices = @transform_3, window_bounds = array<i64: 8, 1>}]} {
    %c0 = arith.constant 0 : index
    %c0_0 = arith.constant 0 : index
    %0 = vector.load %arg1[%c0, %c0_0] : memref<8x447xf32, #tpu.memory_space<vmem>>, vector<8x447xf32>
    %c0_1 = arith.constant 0 : index
    %c0_2 = arith.constant 0 : index
    %1 = vector.load %arg2[%c0_1, %c0_2] : memref<447x1xf32, #tpu.memory_space<vmem>>, vector<447x1xf32>
    %cst = arith.constant dense<0.000000e+00> : vector<8x1xf32>
    %2 = tpu.matmul %0, %1, %cst {dimension_numbers = #tpu.dot_dimension_numbers<[1], [0], [0], [1], [0, 0, 1, 1], [], []>} : vector<8x447xf32>, vector<447x1xf32>, vector<8x1xf32> -> vector<8x1xf32>
    %c0_3 = arith.constant 0 : index
    %c0_4 = arith.constant 0 : index
    %3 = memref.load %arg3[%c0_3, %c0_4] : memref<1x1xf32, #tpu.memory_space<smem>>
    %4 = vector.broadcast %3 : f32 to vector<8x1xf32>
    %5 = arith.addf %2, %4 : vector<8x1xf32>
    %6 = arith.negf %5 : vector<8x1xf32>
    %7 = math.exp %6 : vector<8x1xf32>
    %cst_5 = arith.constant 1.000000e+00 : f32
    %8 = vector.broadcast %cst_5 : f32 to vector<8x1xf32>
    %9 = arith.addf %8, %7 : vector<8x1xf32>
    %10 = arith.divf %8, %9 : vector<8x1xf32>
    %cst_6 = arith.constant 1.200000e+01 : f32
    %11 = vector.broadcast %cst_6 : f32 to vector<8x1xf32>
    %12 = arith.mulf %10, %11 : vector<8x1xf32>
    %c0_7 = arith.constant 0 : index
    %c0_8 = arith.constant 0 : index
    %13 = vector.load %arg4[%c0_7, %c0_8] : memref<8x1xf32, #tpu.memory_space<vmem>>, vector<8x1xf32>
    tpu.vector_store %arg4[%c0_7, %c0_8], %12 {strides = array<i32>} : memref<8x1xf32, #tpu.memory_space<vmem>>, vector<8x1xf32>,
    return
  }
  func.func @transform_0(%arg0: i32) -> (i32, i32) {
    %c0_i32 = arith.constant 0 : i32
    %c0_i32_0 = arith.constant 0 : i32
    return %arg0, %c0_i32 : i32, i32
  }
  func.func @transform_1(%arg0: i32) -> (i32, i32) {
    %c0_i32 = arith.constant 0 : i32
    %c0_i32_0 = arith.constant 0 : i32
    %c0_i32_1 = arith.constant 0 : i32
    return %c0_i32, %c0_i32_0 : i32, i32
  }
  func.func @transform_2(%arg0: i32) -> (i32, i32) {
    %c0_i32 = arith.constant 0 : i32
    %c0_i32_0 = arith.constant 0 : i32
    %c0_i32_1 = arith.constant 0 : i32
    return %c0_i32, %c0_i32_0 : i32, i32
  }
  func.func @transform_3(%arg0: i32) -> (i32, i32) {
    %c0_i32 = arith.constant 0 : i32
    %c0_i32_0 = arith.constant 0 : i32
    return %arg0, %c0_i32 : i32, i32
  }
}

</mosaic_0001>

<llo_original>
// kernel: _direct_nonlinear_nn_impl.1
$region0: #{_direct_nonlinear_nn_impl.1}
  #allocation0 [shape = 'u32[]', space=smem, size = 0x4, offset = 0x4, fixed_abs, tag = 'smem constant byte address 0x4 - core index']
  #allocation1 [shape = 'u32[72,128]{1,0:T(1,128)}', space=vmem, size = 0x9000, scoped, tag = 'internal scratch']
  #allocation2 [shape = 'f32[1,1]{1,0:T(1,128)S(6)}', space=smem, size = 0x200, scoped, tag = 'scoped memory for _direct_nonlinear_nn_impl.1']
  %s0 = inlined_call_operand.vmem [shape: f32[8,447], index: 0, kind: input, shape index: {}]
  %s1 = inlined_call_operand.vmem [shape: f32[447,1], index: 1, kind: input, shape index: {}]
  %s2 = inlined_call_operand.<no memory space> [shape: f32[1,1], index: 2, kind: input, shape index: {}]
  %s3 = inlined_call_operand.vmem [shape: f32[8,1], index: 3, kind: output, shape index: {}]
  %s4 = sld [smem:[#allocation0]]
  $region22: #{_direct_nonlinear_nn_impl.1} parent=0
    _
  %s6 = ssub.s32 1, %s4
  %s7 = scalar_select 0, %s6, %s4
  %8 = sst [smem:[#allocation2]] %s2
  // Predicated region
  $region2: #{_direct_nonlinear_nn_impl.1} parent=0 // pred_check
    _
  $region3: #{_direct_nonlinear_nn_impl.1} parent=0 // pred_check_branch
    %10 = sbr.rel (0) target = $region5
  $region4: #{_direct_nonlinear_nn_impl.1} parent=0 // pred_region
    _
  $region5: #{_direct_nonlinear_nn_impl.1} parent=0 // pred_fallthru
    _
  // Predicated region
  $region6: #{_direct_nonlinear_nn_impl.1} parent=0 // pred_check
    _
  $region7: #{_direct_nonlinear_nn_impl.1} parent=0 // pred_check_branch
    %12 = sbr.rel (0) target = $region9
  $region8: #{_direct_nonlinear_nn_impl.1} parent=0 // pred_region
    _
  $region9: #{_direct_nonlinear_nn_impl.1} parent=0 // pred_fallthru
    _
  // Predicated region
  $region10: #{_direct_nonlinear_nn_impl.1} parent=0 // pred_check
    _
  $region11: #{_direct_nonlinear_nn_impl.1} parent=0 // pred_check_branch
    %14 = sbr.rel (0) target = $region13
  $region12: #{_direct_nonlinear_nn_impl.1} parent=0 // pred_region
    _
  $region13: #{_direct_nonlinear_nn_impl.1} parent=0 // pred_fallthru
    _
  %v15 = vld [vmem:[%s0] sm:$0xff]
  %v16 = vld [vmem:[%s0 + $0x8] sm:$0xff]
  %v17 = vld [vmem:[%s0 + $0x10] sm:$0xff]
  %v18 = vld [vmem:[%s0 + $0x18] sm:$0xff]
  %v19 = vld [vmem:[%s1] sm:$0xff]
  %v20 = vld [vmem:[%s1 + $0x8] sm:$0xff]
  %v21 = vld [vmem:[%s1 + $0x10] sm:$0xff]
  %v22 = vld [vmem:[%s1 + $0x18] sm:$0xff]
  %v23 = vld [vmem:[%s1 + $0x20] sm:$0xff]
  %v24 = vld [vmem:[%s1 + $0x28] sm:$0xff]
  %v25 = vld [vmem:[%s1 + $0x30] sm:$0xff]
  %v26 = vld [vmem:[%s1 + $0x38] sm:$0xff]
  %v27 = vld [vmem:[%s1 + $0x40] sm:$0xff]
  %v28 = vld [vmem:[%s1 + $0x48] sm:$0xff]
  %v29 = vld [vmem:[%s1 + $0x50] sm:$0xff]
  %v30 = vld [vmem:[%s1 + $0x58] sm:$0xff]
  %v31 = vld [vmem:[%s1 + $0x60] sm:$0xff]
  %v32 = vld [vmem:[%s1 + $0x68] sm:$0xff]
  %v33 = vld [vmem:[%s1 + $0x70] sm:$0xff]
  %v34 = vld [vmem:[%s1 + $0x78] sm:$0xff]
  %v35 = vld [vmem:[%s1 + $0x80] sm:$0xff]
  %v36 = vld [vmem:[%s1 + $0x88] sm:$0xff]
  %v37 = vld [vmem:[%s1 + $0x90] sm:$0xff]
  %v38 = vld [vmem:[%s1 + $0x98] sm:$0xff]
  %v39 = vld [vmem:[%s1 + $0xa0] sm:$0xff]
  %v40 = vld [vmem:[%s1 + $0xa8] sm:$0xff]
  %v41 = vld [vmem:[%s1 + $0xb0] sm:$0xff]
  %v42 = vld [vmem:[%s1 + $0xb8] sm:$0xff]
  %v43 = vld [vmem:[%s1 + $0xc0] sm:$0xff]
  %v44 = vld [vmem:[%s1 + $0xc8] sm:$0xff]
  %v45 = vld [vmem:[%s1 + $0xd0] sm:$0xff]
  %v46 = vld [vmem:[%s1 + $0xd8] sm:$0xff]
  %v47 = vld [vmem:[%s1 + $0xe0] sm:$0xff]
  %v48 = vld [vmem:[%s1 + $0xe8] sm:$0xff]
  %v49 = vld [vmem:[%s1 + $0xf0] sm:$0xff]
  %v50 = vld [vmem:[%s1 + $0xf8] sm:$0xff]
  %v51 = vld [vmem:[%s1 + $0x100] sm:$0xff]
  %v52 = vld [vmem:[%s1 + $0x108] sm:$0xff]
  %v53 = vld [vmem:[%s1 + $0x110] sm:$0xff]
  %v54 = vld [vmem:[%s1 + $0x118] sm:$0xff]
  %v55 = vld [vmem:[%s1 + $0x120] sm:$0xff]
  %v56 = vld [vmem:[%s1 + $0x128] sm:$0xff]
  %v57 = vld [vmem:[%s1 + $0x130] sm:$0xff]
  %v58 = vld [vmem:[%s1 + $0x138] sm:$0xff]
  %v59 = vld [vmem:[%s1 + $0x140] sm:$0xff]
  %v60 = vld [vmem:[%s1 + $0x148] sm:$0xff]
  %v61 = vld [vmem:[%s1 + $0x150] sm:$0xff]
  %v62 = vld [vmem:[%s1 + $0x158] sm:$0xff]
  %v63 = vld [vmem:[%s1 + $0x160] sm:$0xff]
  %v64 = vld [vmem:[%s1 + $0x168] sm:$0xff]
  %v65 = vld [vmem:[%s1 + $0x170] sm:$0xff]
  %v66 = vld [vmem:[%s1 + $0x178] sm:$0xff]
  %v67 = vld [vmem:[%s1 + $0x180] sm:$0xff]
  %v68 = vld [vmem:[%s1 + $0x188] sm:$0xff]
  %v69 = vld [vmem:[%s1 + $0x190] sm:$0xff]
  %v70 = vld [vmem:[%s1 + $0x198] sm:$0xff]
  %v71 = vld [vmem:[%s1 + $0x1a0] sm:$0xff]
  %v72 = vld [vmem:[%s1 + $0x1a8] sm:$0xff]
  %v73 = vld [vmem:[%s1 + $0x1b0] sm:$0xff]
  %v74 = vld [vmem:[%s1 + $0x1b8] sm:$0x7f]
  %s75 = sld [smem:[#allocation2]]
  %v76 = vstv %s75
  %vm77 = vcmask 515072
  %v79 = vsel %vm77, %v18, 0
  %vm81 = vcmask 1046528
  %v83 = vsel %vm81, %v74, 0
  %85 = vmatpush.msra.mxu0 %v34
  %86 = vmatpush.msra.mxu0 %v33
  %87 = vmatpush.msra.mxu0 %v32
  %88 = vmatpush.msra.mxu0 %v31
  %89 = vmatpush.msra.mxu0 %v30
  %90 = vmatpush.msra.mxu0 %v29
  %91 = vmatpush.msra.mxu0 %v28
  %92 = vmatpush.msra.mxu0 %v27
  %93 = vmatpush.msra.mxu0 %v26
  %94 = vmatpush.msra.mxu0 %v25
  %95 = vmatpush.msra.mxu0 %v24
  %96 = vmatpush.msra.mxu0 %v23
  %97 = vmatpush.msra.mxu0 %v22
  %98 = vmatpush.msra.mxu0 %v21
  %99 = vmatpush.msra.mxu0 %v20
  %100 = vmatpush.msra.mxu0 %v19
  %101 = vmatmul.f32.gmra.mxu0 %v15
  %v102 = vpop.f32.mrf.mxu0
  %v103 = vadd.f32 %v76, %v102
  %104 = vdwg.mxu0
  %105 = vmatpush.msra.mxu0 %v50
  %106 = vmatpush.msra.mxu0 %v49
  %107 = vmatpush.msra.mxu0 %v48
  %108 = vmatpush.msra.mxu0 %v47
  %109 = vmatpush.msra.mxu0 %v46
  %110 = vmatpush.msra.mxu0 %v45
  %111 = vmatpush.msra.mxu0 %v44
  %112 = vmatpush.msra.mxu0 %v43
  %113 = vmatpush.msra.mxu0 %v42
  %114 = vmatpush.msra.mxu0 %v41
  %115 = vmatpush.msra.mxu0 %v40
  %116 = vmatpush.msra.mxu0 %v39
  %117 = vmatpush.msra.mxu0 %v38
  %118 = vmatpush.msra.mxu0 %v37
  %119 = vmatpush.msra.mxu0 %v36
  %120 = vmatpush.msra.mxu0 %v35
  %121 = vmatmul.f32.gmra.mxu0 %v16
  %v122 = vpop.f32.mrf.mxu0
  %v123 = vadd.f32 %v103, %v122
  %124 = vdwg.mxu0
  %125 = vmatpush.msra.mxu0 %v66
  %126 = vmatpush.msra.mxu0 %v65
  %127 = vmatpush.msra.mxu0 %v64
  %128 = vmatpush.msra.mxu0 %v63
  %129 = vmatpush.msra.mxu0 %v62
  %130 = vmatpush.msra.mxu0 %v61
  %131 = vmatpush.msra.mxu0 %v60
  %132 = vmatpush.msra.mxu0 %v59
  %133 = vmatpush.msra.mxu0 %v58
  %134 = vmatpush.msra.mxu0 %v57
  %135 = vmatpush.msra.mxu0 %v56
  %136 = vmatpush.msra.mxu0 %v55
  %137 = vmatpush.msra.mxu0 %v54
  %138 = vmatpush.msra.mxu0 %v53
  %139 = vmatpush.msra.mxu0 %v52
  %140 = vmatpush.msra.mxu0 %v51
  %141 = vmatmul.f32.gmra.mxu0 %v17
  %v142 = vpop.f32.mrf.mxu0
  %v143 = vadd.f32 %v123, %v142
  %144 = vdwg.mxu0
  %145 = vmatpush.msra.mxu0 0.0
  %146 = vmatpush.msra.mxu0 0.0
  %147 = vmatpush.msra.mxu0 0.0
  %148 = vmatpush.msra.mxu0 0.0
  %149 = vmatpush.msra.mxu0 0.0
  %150 = vmatpush.msra.mxu0 0.0
  %151 = vmatpush.msra.mxu0 0.0
  %152 = vmatpush.msra.mxu0 0.0
  %153 = vmatpush.msra.mxu0 %v83
  %154 = vmatpush.msra.mxu0 %v73
  %155 = vmatpush.msra.mxu0 %v72
  %156 = vmatpush.msra.mxu0 %v71
  %157 = vmatpush.msra.mxu0 %v70
  %158 = vmatpush.msra.mxu0 %v69
  %159 = vmatpush.msra.mxu0 %v68
  %160 = vmatpush.msra.mxu0 %v67
  %161 = vmatmul.f32.gmra.mxu0 %v79
  %v162 = vpop.f32.mrf.mxu0
  %v163 = vadd.f32 %v143, %v162
  %164 = vdwg.mxu0
  %v165 = vxor.u32 %v163, 2147483648
  %v166 = vmul.f32 %v165, 1.442695
  %v167 = vpow.pop %v166
  %v168 = vadd.f32 %v167, 1.0
  %v169 = vrcp.pop %v168
  %v170 = vmul.f32 %v168, %v169
  %v171 = vsub.f32 1.0, %v170
  %v172 = vmul.f32 %v169, %v171
  %v173 = vadd.f32 %v169, %v172
  %vm174 = vweird.f32 %v168
  %vm175 = vweird.f32 %v169
  %vm176 = vmor %vm174, %vm175
  %v177 = vsel %vm176, %v169, %v173
  %v178 = vand.u32 2147483647, %v168
  %vm179 = vcmp.eq.f32.partialorder %v178, 8.507059e+37
  %v180 = vand.u32 %v168, 2147483648
  %v181 = vor.u32 1.1754944e-38, %v180
  %v182 = vsel %vm179, %v181, %v177
  %v183 = vmul.f32 1.0, %v182
  %v184 = vmul.f32 %v183, 12.0
  %vm185 = vcmask 7168
  %186 = vst.msk [vmem:[%s3] sm:$0xff] %vm185, %v184
  // Predicated region
  $region14: #{_direct_nonlinear_nn_impl.1} parent=0 // pred_check
    _
  $region15: #{_direct_nonlinear_nn_impl.1} parent=0 // pred_check_branch
    %188 = sbr.rel (0) target = $region17
  $region16: #{_direct_nonlinear_nn_impl.1} parent=0 // pred_region
    _
  $region17: #{_direct_nonlinear_nn_impl.1} parent=0 // pred_fallthru
    _
  // Predicated region
  $region18: #{_direct_nonlinear_nn_impl.1} parent=0 // pred_check
    _
  $region19: #{_direct_nonlinear_nn_impl.1} parent=0 // pred_check_branch
    %190 = sbr.rel (0) target = $region21
  $region20: #{_direct_nonlinear_nn_impl.1} parent=0 // pred_region
    _
  $region21: #{_direct_nonlinear_nn_impl.1} parent=0 // pred_fallthru
    _

</llo_original>
